<compile_context>
chip_gen: v6e
topology: v6e:2x2x1
jax: 0.10.0
libtpu: 0.0.40
codegen_flags: <defaults>
</compile_context>

<pallas_src>
import functools

import jax
import jax.numpy as jnp
from jax import lax
from jax.experimental import pallas as pl
from jax.experimental.pallas import tpu as pltpu


def _silu(v):
    # silu(x) = x * sigmoid(x).  exp and the approximate reciprocal both issue
    # on the EUP slot (otherwise idle here), freeing VPU slots.
    return v * pl.reciprocal(1.0 + jnp.exp(-v), approx=True)


def rewardnet_kernel(x_ref, w1_ref, b1_ref, w2_ref, b2_ref,
                     w3_ref, b3_ref, w4_ref, b4_ref, o_ref):
    # Hidden layers: bf16 MXU operands, f32 accumulation.
    x = x_ref[...].astype(jnp.bfloat16)
    h = _silu(jnp.dot(x, w1_ref[...], preferred_element_type=jnp.float32)
              + b1_ref[...])
    h = _silu(jnp.dot(h.astype(jnp.bfloat16), w2_ref[...],
                      preferred_element_type=jnp.float32) + b2_ref[...])
    h = _silu(jnp.dot(h.astype(jnp.bfloat16), w3_ref[...],
                      preferred_element_type=jnp.float32) + b3_ref[...])
    # Final 64 -> 1 layer (f32), written lane-dense as a (1, tile) row:
    # contract w4_row (1, 64) against h (tile, 64) over the feature axis.
    r = lax.dot_general(w4_ref[...], h,
                        dimension_numbers=(((1,), (1,)), ((), ())),
                        preferred_element_type=jnp.float32)   # (1, tile)
    o_ref[...] = (r + b4_ref[...]).astype(o_ref.dtype)


def init_params(key, input_size):
    """Deterministic init mimicking nn.Linear's U(-1/sqrt(fan_in), 1/sqrt(fan_in))."""
    layer_sizes = [(input_size, 256), (256, 128), (128, 64), (64, 1)]
    params = []
    for fin, fout in layer_sizes:
        key, kw, kb = jax.random.split(key, 3)
        bound = 1.0 / (fin ** 0.5)
        w = jax.random.uniform(kw, (fin, fout), jnp.float32, -bound, bound)
        b = jax.random.uniform(kb, (1, fout), jnp.float32, -bound, bound)
        params += [w, b]
    return tuple(params)


def _choose_tile(batch):
    """Single block for small batches; 512-row (lane-aligned) tiles otherwise,
    so larger batches get >= 2 parallel grid blocks (keeps both v7x TCs busy)."""
    b8 = ((batch + 7) // 8) * 8
    return b8 if b8 <= 512 else 512


@functools.partial(jax.jit, static_argnames=("action_size", "batch_tile"))
def rewardnet_forward(params, state, action, goal_delta, target_onehot,
                      *, action_size, batch_tile=None):
    # ---- glue: matches the PyTorch forward preamble ----
    if action.ndim == 2:
        action = action[:, 0]                          # action.squeeze(1)
    action_onehot = jax.nn.one_hot(action, action_size, dtype=state.dtype)
    x = jnp.concatenate([state, action_onehot, goal_delta, target_onehot],
                        axis=1)

    B, F = x.shape
    tile = batch_tile if batch_tile is not None else _choose_tile(B)
    Bp = ((B + tile - 1) // tile) * tile
    x_pad = jnp.pad(x, ((0, Bp - B), (0, 0)))          # zero rows -> sliced off

    w1, b1, w2, b2, w3, b3, w4, b4 = params
    # One-time casts / reshapes (folded by XLA): bf16 MXU operands for the
    # hidden layers, row-vector form of the final projection.
    w1b = w1.astype(jnp.bfloat16)
    w2b = w2.astype(jnp.bfloat16)
    w3b = w3.astype(jnp.bfloat16)
    w4r = w4.reshape(1, -1).astype(jnp.float32)        # (1, 64)

    full_block = lambda i: (0, 0)

    flops = 2 * Bp * (F * 256 + 256 * 128 + 128 * 64 + 64)
    transcendentals = Bp * (256 + 128 + 64)            # one exp per SiLU element
    bytes_accessed = (Bp * F * 4 + Bp * 4
                      + (F * 256 + 256 * 128 + 128 * 64) * 2
                      + (256 + 128 + 64 + 64 + 1) * 4)

    out_row = pl.pallas_call(
        rewardnet_kernel,
        out_shape=jax.ShapeDtypeStruct((1, Bp), jnp.float32),
        grid=(Bp // tile,),
        in_specs=[
            pl.BlockSpec((tile, F), lambda i: (i, 0)),
            pl.BlockSpec(w1b.shape, full_block), pl.BlockSpec(b1.shape, full_block),
            pl.BlockSpec(w2b.shape, full_block), pl.BlockSpec(b2.shape, full_block),
            pl.BlockSpec(w3b.shape, full_block), pl.BlockSpec(b3.shape, full_block),
            pl.BlockSpec(w4r.shape, full_block), pl.BlockSpec(b4.shape, full_block),
        ],
        out_specs=pl.BlockSpec((1, tile), lambda i: (0, i)),
        compiler_params=pltpu.CompilerParams(
            dimension_semantics=("parallel",)),
        cost_estimate=pl.CostEstimate(
            flops=flops, transcendentals=transcendentals,
            bytes_accessed=bytes_accessed),
    )(x_pad, w1b, b1, w2b, b2, w3b, b3, w4r, b4)

    return out_row[0, :B][:, None]                     # (B, 1)


def rewardnet_reference(params, state, action, goal_delta, target_onehot,
                        action_size):
    """Pure-JAX f32 reference of the PyTorch forward (for correctness check)."""
    if action.ndim == 2:
        action = action[:, 0]
    ah = jax.nn.one_hot(action, action_size, dtype=state.dtype)
    x = jnp.concatenate([state, ah, goal_delta, target_onehot], axis=1)
    w1, b1, w2, b2, w3, b3, w4, b4 = params
    x = jax.nn.silu(x @ w1 + b1)
    x = jax.nn.silu(x @ w2 + b2)
    x = jax.nn.silu(x @ w3 + b3)
    return x @ w4 + b4


if __name__ == "__main__":
    # Small shapes consistent with the module.
    state_size, action_size, goal_dim, target_count = 8, 4, 3, 2
    input_size = state_size + action_size + goal_dim + target_count  # 17

    key = jax.random.PRNGKey(0)
    kp, kb_small, kb_large = jax.random.split(key, 3)
    params = init_params(kp, input_size)

    def make_inputs(batch, k0):
        k1, k2, k3, k4 = jax.random.split(k0, 4)
        state = jax.random.normal(k1, (batch, state_size), jnp.float32)
        action = jax.random.randint(k2, (batch, 1), 0, action_size)  # (B,1) -> squeeze path
        goal_delta = jax.random.normal(k3, (batch, goal_dim), jnp.float32)
        target_onehot = jax.nn.one_hot(
            jax.random.randint(k4, (batch,), 0, target_count), target_count,
            dtype=jnp.float32)
        return state, action, goal_delta, target_onehot

    # Small batch (single-block path).
    inputs = make_inputs(2, kb_small)
    out = rewardnet_forward(params, *inputs, action_size=action_size)
    out = jax.block_until_ready(out)
    ref = rewardnet_reference(params, *inputs, action_size)
    assert out.shape == (2, 1)
    assert jnp.allclose(out, ref, atol=2e-2, rtol=2e-2), \
        float(jnp.max(jnp.abs(out - ref)))

    # Larger batch exercising the multi-block (tile=512, grid=2) path.
    inputs = make_inputs(600, kb_large)
    out = rewardnet_forward(params, *inputs, action_size=action_size)
    out = jax.block_until_ready(out)
    ref = rewardnet_reference(params, *inputs, action_size)
    assert out.shape == (600, 1)
    assert jnp.allclose(out, ref, atol=2e-2, rtol=2e-2), \
        float(jnp.max(jnp.abs(out - ref)))

    print("KERNEL_OK")
</pallas_src>

<mosaic_0001>
module attributes {stable_mosaic.version = 11 : i64} {
  func.func @rewardnet_kernel(%arg0: i32, %arg1: memref<8x17xf32, #tpu.memory_space<vmem>>, %arg2: memref<17x256xbf16, #tpu.memory_space<vmem>>, %arg3: memref<1x256xf32, #tpu.memory_space<vmem>>, %arg4: memref<256x128xbf16, #tpu.memory_space<vmem>>, %arg5: memref<1x128xf32, #tpu.memory_space<vmem>>, %arg6: memref<128x64xbf16, #tpu.memory_space<vmem>>, %arg7: memref<1x64xf32, #tpu.memory_space<vmem>>, %arg8: memref<1x64xf32, #tpu.memory_space<vmem>>, %arg9: memref<1x1xf32, #tpu.memory_space<vmem>>, %arg10: memref<1x8xf32, #tpu.memory_space<vmem>>) attributes {dimension_semantics = [#tpu.dimension_semantics<parallel>], iteration_bounds = array<i64: 1>, scalar_prefetch = 0 : i64, scratch_operands = 0 : i64, tpu.core_type = #tpu.core_type<tc>, window_params = [{transform_indices = @transform_0, window_bounds = array<i64: 8, 17>}, {pipeline_mode = #tpu.pipeline_mode<synchronous>, transform_indices = @transform_1, window_bounds = array<i64: 17, 256>}, {pipeline_mode = #tpu.pipeline_mode<synchronous>, transform_indices = @transform_2, window_bounds = array<i64: 1, 256>}, {pipeline_mode = #tpu.pipeline_mode<synchronous>, transform_indices = @transform_3, window_bounds = array<i64: 256, 128>}, {pipeline_mode = #tpu.pipeline_mode<synchronous>, transform_indices = @transform_4, window_bounds = array<i64: 1, 128>}, {pipeline_mode = #tpu.pipeline_mode<synchronous>, transform_indices = @transform_5, window_bounds = array<i64: 128, 64>}, {pipeline_mode = #tpu.pipeline_mode<synchronous>, transform_indices = @transform_6, window_bounds = array<i64: 1, 64>}, {pipeline_mode = #tpu.pipeline_mode<synchronous>, transform_indices = @transform_7, window_bounds = array<i64: 1, 64>}, {pipeline_mode = #tpu.pipeline_mode<synchronous>, transform_indices = @transform_8, window_bounds = array<i64: 1, 1>}, {transform_indices = @transform_9, window_bounds = array<i64: 1, 8>}]} {
    %c0 = arith.constant 0 : index
    %c0_0 = arith.constant 0 : index
    %0 = vector.load %arg1[%c0, %c0_0] : memref<8x17xf32, #tpu.memory_space<vmem>>, vector<8x17xf32>
    %1 = arith.truncf %0 : vector<8x17xf32> to vector<8x17xbf16>
    %c0_1 = arith.constant 0 : index
    %c0_2 = arith.constant 0 : index
    %2 = vector.load %arg2[%c0_1, %c0_2] : memref<17x256xbf16, #tpu.memory_space<vmem>>, vector<17x256xbf16>
    %cst = arith.constant dense<0.000000e+00> : vector<8x256xf32>
    %3 = tpu.matmul %1, %2, %cst {dimension_numbers = #tpu.dot_dimension_numbers<[1], [0], [0], [1], [0, 0, 1, 1], [], []>} : vector<8x17xbf16>, vector<17x256xbf16>, vector<8x256xf32> -> vector<8x256xf32>
    %c0_3 = arith.constant 0 : index
    %c0_4 = arith.constant 0 : index
    %4 = vector.load %arg3[%c0_3, %c0_4] : memref<1x256xf32, #tpu.memory_space<vmem>>, vector<1x256xf32>
    %5 = vector.broadcast %4 : vector<1x256xf32> to vector<8x256xf32>
    %6 = arith.addf %3, %5 : vector<8x256xf32>
    %cst_5 = arith.constant 0.000000e+00 : f32
    %7 = vector.broadcast %cst_5 : f32 to vector<8x256xf32>
    %8 = arith.subf %7, %6 : vector<8x256xf32>
    %9 = math.exp %8 : vector<8x256xf32>
    %cst_6 = arith.constant 1.000000e+00 : f32
    %10 = vector.broadcast %cst_6 : f32 to vector<8x256xf32>
    %11 = arith.addf %10, %9 : vector<8x256xf32>
    %12 = tpu.reciprocal %11 {approx = true} : vector<8x256xf32> -> vector<8x256xf32>
    %13 = arith.mulf %6, %12 : vector<8x256xf32>
    %14 = arith.truncf %13 : vector<8x256xf32> to vector<8x256xbf16>
    %c0_7 = arith.constant 0 : index
    %c0_8 = arith.constant 0 : index
    %15 = vector.load %arg4[%c0_7, %c0_8] : memref<256x128xbf16, #tpu.memory_space<vmem>>, vector<256x128xbf16>
    %cst_9 = arith.constant dense<0.000000e+00> : vector<8x128xf32>
    %16 = tpu.matmul %14, %15, %cst_9 {dimension_numbers = #tpu.dot_dimension_numbers<[1], [0], [0], [1], [0, 0, 1, 1], [], []>} : vector<8x256xbf16>, vector<256x128xbf16>, vector<8x128xf32> -> vector<8x128xf32>
    %c0_10 = arith.constant 0 : index
    %c0_11 = arith.constant 0 : index
    %17 = vector.load %arg5[%c0_10, %c0_11] : memref<1x128xf32, #tpu.memory_space<vmem>>, vector<1x128xf32>
    %18 = vector.broadcast %17 : vector<1x128xf32> to vector<8x128xf32>
    %19 = arith.addf %16, %18 : vector<8x128xf32>
    %cst_12 = arith.constant 0.000000e+00 : f32
    %20 = vector.broadcast %cst_12 : f32 to vector<8x128xf32>
    %21 = arith.subf %20, %19 : vector<8x128xf32>
    %22 = math.exp %21 : vector<8x128xf32>
    %cst_13 = arith.constant 1.000000e+00 : f32
    %23 = vector.broadcast %cst_13 : f32 to vector<8x128xf32>
    %24 = arith.addf %23, %22 : vector<8x128xf32>
    %25 = tpu.reciprocal %24 {approx = true} : vector<8x128xf32> -> vector<8x128xf32>
    %26 = arith.mulf %19, %25 : vector<8x128xf32>
    %27 = arith.truncf %26 : vector<8x128xf32> to vector<8x128xbf16>
    %c0_14 = arith.constant 0 : index
    %c0_15 = arith.constant 0 : index
    %28 = vector.load %arg6[%c0_14, %c0_15] : memref<128x64xbf16, #tpu.memory_space<vmem>>, vector<128x64xbf16>
    %cst_16 = arith.constant dense<0.000000e+00> : vector<8x64xf32>
    %29 = tpu.matmul %27, %28, %cst_16 {dimension_numbers = #tpu.dot_dimension_numbers<[1], [0], [0], [1], [0, 0, 1, 1], [], []>} : vector<8x128xbf16>, vector<128x64xbf16>, vector<8x64xf32> -> vector<8x64xf32>
    %c0_17 = arith.constant 0 : index
    %c0_18 = arith.constant 0 : index
    %30 = vector.load %arg7[%c0_17, %c0_18] : memref<1x64xf32, #tpu.memory_space<vmem>>, vector<1x64xf32>
    %31 = vector.broadcast %30 : vector<1x64xf32> to vector<8x64xf32>
    %32 = arith.addf %29, %31 : vector<8x64xf32>
    %cst_19 = arith.constant 0.000000e+00 : f32
    %33 = vector.broadcast %cst_19 : f32 to vector<8x64xf32>
    %34 = arith.subf %33, %32 : vector<8x64xf32>
    %35 = math.exp %34 : vector<8x64xf32>
    %cst_20 = arith.constant 1.000000e+00 : f32
    %36 = vector.broadcast %cst_20 : f32 to vector<8x64xf32>
    %37 = arith.addf %36, %35 : vector<8x64xf32>
    %38 = tpu.reciprocal %37 {approx = true} : vector<8x64xf32> -> vector<8x64xf32>
    %39 = arith.mulf %32, %38 : vector<8x64xf32>
    %c0_21 = arith.constant 0 : index
    %c0_22 = arith.constant 0 : index
    %40 = vector.load %arg8[%c0_21, %c0_22] : memref<1x64xf32, #tpu.memory_space<vmem>>, vector<1x64xf32>
    %cst_23 = arith.constant dense<0.000000e+00> : vector<1x8xf32>
    %41 = tpu.matmul %40, %39, %cst_23 {dimension_numbers = #tpu.dot_dimension_numbers<[1], [1], [0], [0], [0, 0, 1, 0], [], []>} : vector<1x64xf32>, vector<8x64xf32>, vector<1x8xf32> -> vector<1x8xf32>
    %c0_24 = arith.constant 0 : index
    %c0_25 = arith.constant 0 : index
    %42 = vector.load %arg9[%c0_24, %c0_25] : memref<1x1xf32, #tpu.memory_space<vmem>>, vector<1x1xf32>
    %43 = vector.broadcast %42 : vector<1x1xf32> to vector<1x8xf32>
    %44 = arith.addf %41, %43 : vector<1x8xf32>
    %c0_26 = arith.constant 0 : index
    %c0_27 = arith.constant 0 : index
    %45 = vector.load %arg10[%c0_26, %c0_27] : memref<1x8xf32, #tpu.memory_space<vmem>>, vector<1x8xf32>
    tpu.vector_store %arg10[%c0_26, %c0_27], %44 {strides = array<i32>} : memref<1x8xf32, #tpu.memory_space<vmem>>, vector<1x8xf32>,
    return
  }
  func.func @transform_0(%arg0: i32) -> (i32, i32) {
    %c0_i32 = arith.constant 0 : i32
    %c0_i32_0 = arith.constant 0 : i32
    return %arg0, %c0_i32 : i32, i32
  }
  func.func @transform_1(%arg0: i32) -> (i32, i32) {
    %c0_i32 = arith.constant 0 : i32
    %c0_i32_0 = arith.constant 0 : i32
    %c0_i32_1 = arith.constant 0 : i32
    return %c0_i32, %c0_i32_0 : i32, i32
  }
  func.func @transform_2(%arg0: i32) -> (i32, i32) {
    %c0_i32 = arith.constant 0 : i32
    %c0_i32_0 = arith.constant 0 : i32
    %c0_i32_1 = arith.constant 0 : i32
    return %c0_i32, %c0_i32_0 : i32, i32
  }
  func.func @transform_3(%arg0: i32) -> (i32, i32) {
    %c0_i32 = arith.constant 0 : i32
    %c0_i32_0 = arith.constant 0 : i32
    %c0_i32_1 = arith.constant 0 : i32
    return %c0_i32, %c0_i32_0 : i32, i32
  }
  func.func @transform_4(%arg0: i32) -> (i32, i32) {
    %c0_i32 = arith.constant 0 : i32
    %c0_i32_0 = arith.constant 0 : i32
    %c0_i32_1 = arith.constant 0 : i32
    return %c0_i32, %c0_i32_0 : i32, i32
  }
  func.func @transform_5(%arg0: i32) -> (i32, i32) {
    %c0_i32 = arith.constant 0 : i32
    %c0_i32_0 = arith.constant 0 : i32
    %c0_i32_1 = arith.constant 0 : i32
    return %c0_i32, %c0_i32_0 : i32, i32
  }
  func.func @transform_6(%arg0: i32) -> (i32, i32) {
    %c0_i32 = arith.constant 0 : i32
    %c0_i32_0 = arith.constant 0 : i32
    %c0_i32_1 = arith.constant 0 : i32
    return %c0_i32, %c0_i32_0 : i32, i32
  }
  func.func @transform_7(%arg0: i32) -> (i32, i32) {
    %c0_i32 = arith.constant 0 : i32
    %c0_i32_0 = arith.constant 0 : i32
    %c0_i32_1 = arith.constant 0 : i32
    return %c0_i32, %c0_i32_0 : i32, i32
  }
  func.func @transform_8(%arg0: i32) -> (i32, i32) {
    %c0_i32 = arith.constant 0 : i32
    %c0_i32_0 = arith.constant 0 : i32
    %c0_i32_1 = arith.constant 0 : i32
    return %c0_i32, %c0_i32_0 : i32, i32
  }
  func.func @transform_9(%arg0: i32) -> (i32, i32) {
    %c0_i32 = arith.constant 0 : i32
    %c0_i32_0 = arith.constant 0 : i32
    return %c0_i32, %arg0 : i32, i32
  }
}

</mosaic_0001>

<llo_original>
// kernel: rewardnet_forward.1
$region0: #{rewardnet_forward.1}
  #allocation0 [shape = 'u32[]', space=smem, size = 0x4, offset = 0x4, fixed_abs, tag = 'smem constant byte address 0x4 - core index']
  #allocation1 [shape = 'u32[144,128]{1,0:T(1,128)}', space=vmem, size = 0x12000, scoped, tag = 'internal scratch']
  #allocation2 [shape = 'f32[1,1]{1,0:T(1,128)S(1)}', space=vmem, size = 0x200, scoped, tag = 'scoped memory for rewardnet_forward.1']
  %s0 = inlined_call_operand.vmem [shape: f32[8,17], index: 0, kind: input, shape index: {}]
  %s1 = inlined_call_operand.vmem [shape: bf16[17,256], index: 1, kind: input, shape index: {}]
  %s2 = inlined_call_operand.vmem [shape: f32[1,256], index: 2, kind: input, shape index: {}]
  %s3 = inlined_call_operand.vmem [shape: bf16[256,128], index: 3, kind: input, shape index: {}]
  %s4 = inlined_call_operand.vmem [shape: f32[1,128], index: 4, kind: input, shape index: {}]
  %s5 = inlined_call_operand.vmem [shape: bf16[128,64], index: 5, kind: input, shape index: {}]
  %s6 = inlined_call_operand.vmem [shape: f32[1,64], index: 6, kind: input, shape index: {}]
  %s7 = inlined_call_operand.vmem [shape: f32[1,64], index: 7, kind: input, shape index: {}]
  %s8 = inlined_call_operand.<no memory space> [shape: f32[1,1], index: 8, kind: input, shape index: {}]
  %s9 = inlined_call_operand.vmem [shape: f32[1,8], index: 9, kind: output, shape index: {}]
  %s10 = sld [smem:[#allocation0]]
  $region46: #{rewardnet_forward.1} parent=0
    _
  %s12 = ssub.s32 1, %s10
  %s13 = scalar_select 0, %s12, %s10
  %v14 = vstv %s8
  %15 = vst [vmem:[#allocation2] sm:$0x1] %v14
  // Predicated region
  $region2: #{rewardnet_forward.1} parent=0 // pred_check
    _
  $region3: #{rewardnet_forward.1} parent=0 // pred_check_branch
    %17 = sbr.rel (0) target = $region5
  $region4: #{rewardnet_forward.1} parent=0 // pred_region
    _
  $region5: #{rewardnet_forward.1} parent=0 // pred_fallthru
    _
  // Predicated region
  $region6: #{rewardnet_forward.1} parent=0 // pred_check
    _
  $region7: #{rewardnet_forward.1} parent=0 // pred_check_branch
    %19 = sbr.rel (0) target = $region9
  $region8: #{rewardnet_forward.1} parent=0 // pred_region
    _
  $region9: #{rewardnet_forward.1} parent=0 // pred_fallthru
    _
  // Predicated region
  $region10: #{rewardnet_forward.1} parent=0 // pred_check
    _
  $region11: #{rewardnet_forward.1} parent=0 // pred_check_branch
    %21 = sbr.rel (0) target = $region13
  $region12: #{rewardnet_forward.1} parent=0 // pred_region
    _
  $region13: #{rewardnet_forward.1} parent=0 // pred_fallthru
    _
  // Predicated region
  $region14: #{rewardnet_forward.1} parent=0 // pred_check
    _
  $region15: #{rewardnet_forward.1} parent=0 // pred_check_branch
    %23 = sbr.rel (0) target = $region17
  $region16: #{rewardnet_forward.1} parent=0 // pred_region
    _
  $region17: #{rewardnet_forward.1} parent=0 // pred_fallthru
    _
  // Predicated region
  $region18: #{rewardnet_forward.1} parent=0 // pred_check
    _
  $region19: #{rewardnet_forward.1} parent=0 // pred_check_branch
    %25 = sbr.rel (0) target = $region21
  $region20: #{rewardnet_forward.1} parent=0 // pred_region
    _
  $region21: #{rewardnet_forward.1} parent=0 // pred_fallthru
    _
  // Predicated region
  $region22: #{rewardnet_forward.1} parent=0 // pred_check
    _
  $region23: #{rewardnet_forward.1} parent=0 // pred_check_branch
    %27 = sbr.rel (0) target = $region25
  $region24: #{rewardnet_forward.1} parent=0 // pred_region
    _
  $region25: #{rewardnet_forward.1} parent=0 // pred_fallthru
    _
  // Predicated region
  $region26: #{rewardnet_forward.1} parent=0 // pred_check
    _
  $region27: #{rewardnet_forward.1} parent=0 // pred_check_branch
    %29 = sbr.rel (0) target = $region29
  $region28: #{rewardnet_forward.1} parent=0 // pred_region
    _
  $region29: #{rewardnet_forward.1} parent=0 // pred_fallthru
    _
  // Predicated region
  $region30: #{rewardnet_forward.1} parent=0 // pred_check
    _
  $region31: #{rewardnet_forward.1} parent=0 // pred_check_branch
    %31 = sbr.rel (0) target = $region33
  $region32: #{rewardnet_forward.1} parent=0 // pred_region
    _
  $region33: #{rewardnet_forward.1} parent=0 // pred_fallthru
    _
  // Predicated region
  $region34: #{rewardnet_forward.1} parent=0 // pred_check
    _
  $region35: #{rewardnet_forward.1} parent=0 // pred_check_branch
    %33 = sbr.rel (0) target = $region37
  $region36: #{rewardnet_forward.1} parent=0 // pred_region
    _
  $region37: #{rewardnet_forward.1} parent=0 // pred_fallthru
    _
  %v35 = vld [vmem:[%s0] sm:$0xff]
  %v36 = vpack.c.bf16 %v35, %v35
  %v37 = vld [vmem:[%s1] sm:$0xff]
  %v38 = vld [vmem:[%s1 + $0x8] sm:$0xff]
  %v39 = vld [vmem:[%s1 + $0x10] sm:$0x11]
  %v40 = vld [vmem:[%s2] sm:$0x3]
  %v42 = vlaneseq
  %v43 = vshrl.u32 %v42, 7
  %v44 = vsub.s32 0, %v43
  %v45 = vrot.slane %v40, %v44
  %v46 = vlaneseq
  %v47 = vshrl.u32 %v46, 7
  %v48 = vsub.s32 1, %v47
  %v49 = vrot.slane %v40, %v48
  %v55 = vunpack.c.l.b16 %v37
  %v56 = vunpack.c.h.b16 %v37
  %v57 = vunpack.c.l.b16 %v38
  %v58 = vunpack.c.h.b16 %v38
  %v59 = vunpack.c.l.b16 %v39
  %v60 = vunpack.c.h.b16 %v39
  %v61 = vpack.c.b16 %v57, %v55
  %v62 = vpack.c.b16 %v58, %v56
  %v63 = vpack.c.b16 %v59, %v59
  %v64 = vpack.c.b16 %v60, %v60
  %vm67 = vcmask 138240
  %v69 = vsel %vm67, %v36, 0
  %vm71 = vcmask 1040384
  %v72 = vsel 0, 4294967295, 65535
  %v73 = vsel %vm71, %v72, 0
  %v75 = vand.u32 %v63, %v73
  %v78 = vand.u32 %v64, %v73
  %80 = vmatprep.subr.bf16.mxu0 0
  %81 = vmatpush1.bf16.msra.mxu0 0
  %82 = vmatprep.subr.bf16.mxu0 0
  %83 = vmatpush1.bf16.msra.mxu0 0
  %84 = vmatprep.subr.bf16.mxu0 0
  %85 = vmatpush1.bf16.msra.mxu0 0
  %86 = vmatprep.subr.bf16.mxu0 0
  %87 = vmatpush1.bf16.msra.mxu0 0
  %88 = vmatprep.subr.bf16.mxu0 0
  %89 = vmatpush1.bf16.msra.mxu0 0
  %90 = vmatprep.subr.bf16.mxu0 0
  %91 = vmatpush1.bf16.msra.mxu0 0
  %92 = vmatprep.subr.bf16.mxu0 %v78
  %93 = vmatpush1.bf16.msra.mxu0 %v75
  %94 = vmatprep.subr.bf16.mxu0 %v62
  %95 = vmatpush1.bf16.msra.mxu0 %v61
  %96 = vmatprep.subr.bf16.mxu0 0
  %97 = vmatpush2.bf16.msra.mxu0 0
  %98 = vmatprep.subr.bf16.mxu0 0
  %99 = vmatpush2.bf16.msra.mxu0 0
  %100 = vmatprep.subr.bf16.mxu0 0
  %101 = vmatpush2.bf16.msra.mxu0 0
  %102 = vmatprep.subr.bf16.mxu0 0
  %103 = vmatpush2.bf16.msra.mxu0 0
  %104 = vmatprep.subr.bf16.mxu0 0
  %105 = vmatpush2.bf16.msra.mxu0 0
  %106 = vmatprep.subr.bf16.mxu0 0
  %107 = vmatpush2.bf16.msra.mxu0 0
  %108 = vmatprep.subr.bf16.mxu0 0
  %109 = vmatpush2.bf16.msra.mxu0 0
  %110 = vmatprep.subr.bf16.mxu0 0
  %111 = vmatpush2.bf16.msra.mxu0 0
  %112 = vmatprep.mubr.bf16.mxu0 0
  %113 = vmatmul.mubr.bf16.gmra.mxu0 %v69
  %v114 = vpop.f32.mrf.mxu0
  %v115 = vadd.f32 %v45, %v114
  %v116 = vpop.f32.mrf.mxu0
  %v117 = vadd.f32 %v49, %v116
  %v118 = vpop.f32.mrf.mxu0
  %v119 = vpop.f32.mrf.mxu0
  %120 = vdwg.mxu0
  %v121 = vsub.f32 0.0, %v115
  %v122 = vsub.f32 0.0, %v117
  %v123 = vmul.f32 %v121, 1.442695
  %v124 = vpow.pop %v123
  %v125 = vmul.f32 %v122, 1.442695
  %v126 = vpow.pop %v125
  %v127 = vadd.f32 %v124, 1.0
  %v128 = vadd.f32 %v126, 1.0
  %v129 = vrcp.pop %v127
  %v130 = vrcp.pop %v128
  %v131 = vmul.f32 %v115, %v129
  %v132 = vmul.f32 %v117, %v130
  %v133 = vpack.c.bf16 %v131, %v131
  %v134 = vpack.c.bf16 %v132, %v132
  %v135 = vld [vmem:[%s3] sm:$0xf]
  %v136 = vld [vmem:[%s3 + $0x4] sm:$0xf]
  %v137 = vld [vmem:[%s3 + $0x8] sm:$0xf]
  %v138 = vld [vmem:[%s3 + $0xc] sm:$0xf]
  %v139 = vld [vmem:[%s3 + $0x10] sm:$0xf]
  %v140 = vld [vmem:[%s3 + $0x14] sm:$0xf]
  %v141 = vld [vmem:[%s3 + $0x18] sm:$0xf]
  %v142 = vld [vmem:[%s3 + $0x1c] sm:$0xf]
  %v143 = vld [vmem:[%s3 + $0x20] sm:$0xf]
  %v144 = vld [vmem:[%s3 + $0x24] sm:$0xf]
  %v145 = vld [vmem:[%s3 + $0x28] sm:$0xf]
  %v146 = vld [vmem:[%s3 + $0x2c] sm:$0xf]
  %v147 = vld [vmem:[%s3 + $0x30] sm:$0xf]
  %v148 = vld [vmem:[%s3 + $0x34] sm:$0xf]
  %v149 = vld [vmem:[%s3 + $0x38] sm:$0xf]
  %v150 = vld [vmem:[%s3 + $0x3c] sm:$0xf]
  %v151 = vld [vmem:[%s3 + $0x40] sm:$0xf]
  %v152 = vld [vmem:[%s3 + $0x44] sm:$0xf]
  %v153 = vld [vmem:[%s3 + $0x48] sm:$0xf]
  %v154 = vld [vmem:[%s3 + $0x4c] sm:$0xf]
  %v155 = vld [vmem:[%s3 + $0x50] sm:$0xf]
  %v156 = vld [vmem:[%s3 + $0x54] sm:$0xf]
  %v157 = vld [vmem:[%s3 + $0x58] sm:$0xf]
  %v158 = vld [vmem:[%s3 + $0x5c] sm:$0xf]
  %v159 = vld [vmem:[%s3 + $0x60] sm:$0xf]
  %v160 = vld [vmem:[%s3 + $0x64] sm:$0xf]
  %v161 = vld [vmem:[%s3 + $0x68] sm:$0xf]
  %v162 = vld [vmem:[%s3 + $0x6c] sm:$0xf]
  %v163 = vld [vmem:[%s3 + $0x70] sm:$0xf]
  %v164 = vld [vmem:[%s3 + $0x74] sm:$0xf]
  %v165 = vld [vmem:[%s3 + $0x78] sm:$0xf]
  %v166 = vld [vmem:[%s3 + $0x7c] sm:$0xf]
  %v167 = vld [vmem:[%s4] sm:$0x1]
  %v169 = vlaneseq
  %v170 = vshrl.u32 %v169, 7
  %v171 = vsub.s32 0, %v170
  %v172 = vrot.slane %v167, %v171
  %v206 = vunpack.c.l.b16 %v135
  %v207 = vunpack.c.l.b16 %v136
  %v208 = vunpack.c.l.b16 %v137
  %v209 = vunpack.c.l.b16 %v138
  %v210 = vunpack.c.l.b16 %v139
  %v211 = vunpack.c.l.b16 %v140
  %v212 = vunpack.c.l.b16 %v141
  %v213 = vunpack.c.l.b16 %v142
  %v214 = vunpack.c.l.b16 %v143
  %v215 = vunpack.c.l.b16 %v144
  %v216 = vunpack.c.l.b16 %v145
  %v217 = vunpack.c.l.b16 %v146
  %v218 = vunpack.c.l.b16 %v147
  %v219 = vunpack.c.l.b16 %v148
  %v220 = vunpack.c.l.b16 %v149
  %v221 = vunpack.c.l.b16 %v150
  %v222 = vunpack.c.l.b16 %v151
  %v223 = vunpack.c.l.b16 %v152
  %v224 = vunpack.c.l.b16 %v153
  %v225 = vunpack.c.l.b16 %v154
  %v226 = vunpack.c.l.b16 %v155
  %v227 = vunpack.c.l.b16 %v156
  %v228 = vunpack.c.l.b16 %v157
  %v229 = vunpack.c.l.b16 %v158
  %v230 = vunpack.c.l.b16 %v159
  %v231 = vunpack.c.l.b16 %v160
  %v232 = vunpack.c.l.b16 %v161
  %v233 = vunpack.c.l.b16 %v162
  %v234 = vunpack.c.l.b16 %v163
  %v235 = vunpack.c.l.b16 %v164
  %v236 = vunpack.c.l.b16 %v165
  %v237 = vunpack.c.l.b16 %v166
  %v238 = vpack.c.b16 %v207, %v206
  %v239 = vpack.c.b16 %v209, %v208
  %v240 = vpack.c.b16 %v211, %v210
  %v241 = vpack.c.b16 %v213, %v212
  %v242 = vpack.c.b16 %v215, %v214
  %v243 = vpack.c.b16 %v217, %v216
  %v244 = vpack.c.b16 %v219, %v218
  %v245 = vpack.c.b16 %v221, %v220
  %v246 = vpack.c.b16 %v223, %v222
  %v247 = vpack.c.b16 %v225, %v224
  %v248 = vpack.c.b16 %v227, %v226
  %v249 = vpack.c.b16 %v229, %v228
  %v250 = vpack.c.b16 %v231, %v230
  %v251 = vpack.c.b16 %v233, %v232
  %v252 = vpack.c.b16 %v235, %v234
  %v253 = vpack.c.b16 %v237, %v236
  %270 = vmatprep.subr.bf16.mxu0 0
  %271 = vmatpush1.bf16.msra.mxu0 %v245
  %272 = vmatprep.subr.bf16.mxu0 0
  %273 = vmatpush1.bf16.msra.mxu0 %v244
  %274 = vmatprep.subr.bf16.mxu0 0
  %275 = vmatpush1.bf16.msra.mxu0 %v243
  %276 = vmatprep.subr.bf16.mxu0 0
  %277 = vmatpush1.bf16.msra.mxu0 %v242
  %278 = vmatprep.subr.bf16.mxu0 0
  %279 = vmatpush1.bf16.msra.mxu0 %v241
  %280 = vmatprep.subr.bf16.mxu0 0
  %281 = vmatpush1.bf16.msra.mxu0 %v240
  %282 = vmatprep.subr.bf16.mxu0 0
  %283 = vmatpush1.bf16.msra.mxu0 %v239
  %284 = vmatprep.subr.bf16.mxu0 0
  %285 = vmatpush1.bf16.msra.mxu0 %v238
  %286 = vmatprep.subr.bf16.mxu0 0
  %287 = vmatpush2.bf16.msra.mxu0 %v253
  %288 = vmatprep.subr.bf16.mxu0 0
  %289 = vmatpush2.bf16.msra.mxu0 %v252
  %290 = vmatprep.subr.bf16.mxu0 0
  %291 = vmatpush2.bf16.msra.mxu0 %v251
  %292 = vmatprep.subr.bf16.mxu0 0
  %293 = vmatpush2.bf16.msra.mxu0 %v250
  %294 = vmatprep.subr.bf16.mxu0 0
  %295 = vmatpush2.bf16.msra.mxu0 %v249
  %296 = vmatprep.subr.bf16.mxu0 0
  %297 = vmatpush2.bf16.msra.mxu0 %v248
  %298 = vmatprep.subr.bf16.mxu0 0
  %299 = vmatpush2.bf16.msra.mxu0 %v247
  %300 = vmatprep.subr.bf16.mxu0 0
  %301 = vmatpush2.bf16.msra.mxu0 %v246
  %302 = vmatprep.mubr.bf16.mxu0 %v134
  %303 = vmatmul.mubr.bf16.gmra.mxu0 %v133
  %v304 = vpop.f32.mrf.mxu0
  %v305 = vadd.f32 %v172, %v304
  %v306 = vpop.f32.mrf.mxu0
  %v307 = vpop.f32.mrf.mxu0
  %v308 = vpop.f32.mrf.mxu0
  %309 = vdwg.mxu0
  %v310 = vsub.f32 0.0, %v305
  %v311 = vmul.f32 %v310, 1.442695
  %v312 = vpow.pop %v311
  %v313 = vadd.f32 %v312, 1.0
  %v314 = vrcp.pop %v313
  %v315 = vmul.f32 %v305, %v314
  %v316 = vpack.c.bf16 %v315, %v315
  %v317 = vld [vmem:[%s5] sm:$0xf]
  %v318 = vld [vmem:[%s5 + $0x4] sm:$0xf]
  %v319 = vld [vmem:[%s5 + $0x8] sm:$0xf]
  %v320 = vld [vmem:[%s5 + $0xc] sm:$0xf]
  %v321 = vld [vmem:[%s5 + $0x10] sm:$0xf]
  %v322 = vld [vmem:[%s5 + $0x14] sm:$0xf]
  %v323 = vld [vmem:[%s5 + $0x18] sm:$0xf]
  %v324 = vld [vmem:[%s5 + $0x1c] sm:$0xf]
  %v325 = vld [vmem:[%s5 + $0x20] sm:$0xf]
  %v326 = vld [vmem:[%s5 + $0x24] sm:$0xf]
  %v327 = vld [vmem:[%s5 + $0x28] sm:$0xf]
  %v328 = vld [vmem:[%s5 + $0x2c] sm:$0xf]
  %v329 = vld [vmem:[%s5 + $0x30] sm:$0xf]
  %v330 = vld [vmem:[%s5 + $0x34] sm:$0xf]
  %v331 = vld [vmem:[%s5 + $0x38] sm:$0xf]
  %v332 = vld [vmem:[%s5 + $0x3c] sm:$0xf]
  %v333 = vld [vmem:[%s6] sm:$0x1]
  %v335 = vlaneseq
  %v336 = vshrl.u32 %v335, 7
  %v337 = vsub.s32 0, %v336
  %v338 = vrot.slane %v333, %v337
  %v356 = vunpack.c.l.b16 %v317
  %v357 = vunpack.c.l.b16 %v318
  %v358 = vunpack.c.l.b16 %v319
  %v359 = vunpack.c.l.b16 %v320
  %v360 = vunpack.c.l.b16 %v321
  %v361 = vunpack.c.l.b16 %v322
  %v362 = vunpack.c.l.b16 %v323
  %v363 = vunpack.c.l.b16 %v324
  %v364 = vunpack.c.l.b16 %v325
  %v365 = vunpack.c.l.b16 %v326
  %v366 = vunpack.c.l.b16 %v327
  %v367 = vunpack.c.l.b16 %v328
  %v368 = vunpack.c.l.b16 %v329
  %v369 = vunpack.c.l.b16 %v330
  %v370 = vunpack.c.l.b16 %v331
  %v371 = vunpack.c.l.b16 %v332
  %v372 = vpack.c.b16 %v357, %v356
  %v373 = vpack.c.b16 %v359, %v358
  %v374 = vpack.c.b16 %v361, %v360
  %v375 = vpack.c.b16 %v363, %v362
  %v376 = vpack.c.b16 %v365, %v364
  %v377 = vpack.c.b16 %v367, %v366
  %v378 = vpack.c.b16 %v369, %v368
  %v379 = vpack.c.b16 %v371, %v370
  %388 = vmatprep.subr.bf16.mxu0 0
  %389 = vmatpush1.bf16.msra.mxu0 %v379
  %390 = vmatprep.subr.bf16.mxu0 0
  %391 = vmatpush1.bf16.msra.mxu0 %v378
  %392 = vmatprep.subr.bf16.mxu0 0
  %393 = vmatpush1.bf16.msra.mxu0 %v377
  %394 = vmatprep.subr.bf16.mxu0 0
  %395 = vmatpush1.bf16.msra.mxu0 %v376
  %396 = vmatprep.subr.bf16.mxu0 0
  %397 = vmatpush1.bf16.msra.mxu0 %v375
  %398 = vmatprep.subr.bf16.mxu0 0
  %399 = vmatpush1.bf16.msra.mxu0 %v374
  %400 = vmatprep.subr.bf16.mxu0 0
  %401 = vmatpush1.bf16.msra.mxu0 %v373
  %402 = vmatprep.subr.bf16.mxu0 0
  %403 = vmatpush1.bf16.msra.mxu0 %v372
  %404 = vmatprep.subr.bf16.mxu0 0
  %405 = vmatpush2.bf16.msra.mxu0 0
  %406 = vmatprep.subr.bf16.mxu0 0
  %407 = vmatpush2.bf16.msra.mxu0 0
  %408 = vmatprep.subr.bf16.mxu0 0
  %409 = vmatpush2.bf16.msra.mxu0 0
  %410 = vmatprep.subr.bf16.mxu0 0
  %411 = vmatpush2.bf16.msra.mxu0 0
  %412 = vmatprep.subr.bf16.mxu0 0
  %413 = vmatpush2.bf16.msra.mxu0 0
  %414 = vmatprep.subr.bf16.mxu0 0
  %415 = vmatpush2.bf16.msra.mxu0 0
  %416 = vmatprep.subr.bf16.mxu0 0
  %417 = vmatpush2.bf16.msra.mxu0 0
  %418 = vmatprep.subr.bf16.mxu0 0
  %419 = vmatpush2.bf16.msra.mxu0 0
  %420 = vmatprep.mubr.bf16.mxu0 0
  %421 = vmatmul.mubr.bf16.gmra.mxu0 %v316
  %v422 = vpop.f32.mrf.mxu0
  %v423 = vadd.f32 %v338, %v422
  %v424 = vpop.f32.mrf.mxu0
  %v425 = vpop.f32.mrf.mxu0
  %v426 = vpop.f32.mrf.mxu0
  %427 = vdwg.mxu0
  %v428 = vsub.f32 0.0, %v423
  %v429 = vmul.f32 %v428, 1.442695
  %v430 = vpow.pop %v429
  %v431 = vadd.f32 %v430, 1.0
  %v432 = vrcp.pop %v431
  %v433 = vmul.f32 %v423, %v432
  %v434 = vld [vmem:[%s7] sm:$0x1]
  %v435 = vld [vmem:[#allocation2] sm:$0x1]
  %437 = vset.pattern.permute.xlu0 0
  %438 = vperm.xlu0 %437, %v435
  %v439 = vpop.permute.xlu0 %438
  %v441 = vlaneseq
  %v442 = vshrl.u32 %v441, 7
  %v443 = vsub.s32 0, %v442
  %v444 = vrot.slane %v439, %v443
  %vm445 = vcmask 523264
  %v447 = vsel %vm445, %v434, 0
  %v450 = vsel %vm445, %v433, 0
  %452 = vmatprep.subr.mxu0 0.0
  %453 = vmatpush1.xpose.msra.mxu0 0.0
  %454 = vmatprep.subr.mxu0 0.0
  %455 = vmatpush1.xpose.msra.mxu0 0.0
  %456 = vmatprep.subr.mxu0 0.0
  %457 = vmatpush1.xpose.msra.mxu0 0.0
  %458 = vmatprep.subr.mxu0 0.0
  %459 = vmatpush1.xpose.msra.mxu0 0.0
  %460 = vmatprep.subr.mxu0 0.0
  %461 = vmatpush1.xpose.msra.mxu0 0.0
  %462 = vmatprep.subr.mxu0 0.0
  %463 = vmatpush1.xpose.msra.mxu0 0.0
  %464 = vmatprep.subr.mxu0 0.0
  %465 = vmatpush1.xpose.msra.mxu0 0.0
  %466 = vmatprep.subr.mxu0 0.0
  %467 = vmatpush1.xpose.msra.mxu0 0.0
  %468 = vmatprep.subr.mxu0 0.0
  %469 = vmatpush1.xpose.msra.mxu0 0.0
  %470 = vmatprep.subr.mxu0 0.0
  %471 = vmatpush1.xpose.msra.mxu0 0.0
  %472 = vmatprep.subr.mxu0 0.0
  %473 = vmatpush1.xpose.msra.mxu0 0.0
  %474 = vmatprep.subr.mxu0 0.0
  %475 = vmatpush1.xpose.msra.mxu0 0.0
  %476 = vmatprep.subr.mxu0 0.0
  %477 = vmatpush1.xpose.msra.mxu0 0.0
  %478 = vmatprep.subr.mxu0 0.0
  %479 = vmatpush1.xpose.msra.mxu0 0.0
  %480 = vmatprep.subr.mxu0 0.0
  %481 = vmatpush1.xpose.msra.mxu0 0.0
  %482 = vmatprep.subr.mxu0 0.0
  %483 = vmatpush1.xpose.msra.mxu0 %v450
  %484 = vmatprep.subr.mxu0 0.0
  %485 = vmatpush2.xpose.msra.mxu0 0.0
  %486 = vmatprep.subr.mxu0 0.0
  %487 = vmatpush2.xpose.msra.mxu0 0.0
  %488 = vmatprep.subr.mxu0 0.0
  %489 = vmatpush2.xpose.msra.mxu0 0.0
  %490 = vmatprep.subr.mxu0 0.0
  %491 = vmatpush2.xpose.msra.mxu0 0.0
  %492 = vmatprep.subr.mxu0 0.0
  %493 = vmatpush2.xpose.msra.mxu0 0.0
  %494 = vmatprep.subr.mxu0 0.0
  %495 = vmatpush2.xpose.msra.mxu0 0.0
  %496 = vmatprep.subr.mxu0 0.0
  %497 = vmatpush2.xpose.msra.mxu0 0.0
  %498 = vmatprep.subr.mxu0 0.0
  %499 = vmatpush2.xpose.msra.mxu0 0.0
  %500 = vmatprep.subr.mxu0 0.0
  %501 = vmatpush2.xpose.msra.mxu0 0.0
  %502 = vmatprep.subr.mxu0 0.0
  %503 = vmatpush2.xpose.msra.mxu0 0.0
  %504 = vmatprep.subr.mxu0 0.0
  %505 = vmatpush2.xpose.msra.mxu0 0.0
  %506 = vmatprep.subr.mxu0 0.0
  %507 = vmatpush2.xpose.msra.mxu0 0.0
  %508 = vmatprep.subr.mxu0 0.0
  %509 = vmatpush2.xpose.msra.mxu0 0.0
  %510 = vmatprep.subr.mxu0 0.0
  %511 = vmatpush2.xpose.msra.mxu0 0.0
  %512 = vmatprep.subr.mxu0 0.0
  %513 = vmatpush2.xpose.msra.mxu0 0.0
  %514 = vmatprep.subr.mxu0 0.0
  %515 = vmatpush2.xpose.msra.mxu0 0.0
  %516 = vmatprep.mubr.f32.mxu0 0.0
  %517 = vmatmul.mubr.f32.gmra.mxu0 %v447
  %v518 = vpop.f32.mrf.mxu0
  %v519 = vadd.f32 %v444, %v518
  %v520 = vpop.f32.mrf.mxu0
  %521 = vdwg.mxu0
  %vm522 = vcmask 57344
  %523 = vst.msk [vmem:[%s9] sm:$0x1] %vm522, %v519
  // Predicated region
  $region38: #{rewardnet_forward.1} parent=0 // pred_check
    _
  $region39: #{rewardnet_forward.1} parent=0 // pred_check_branch
    %525 = sbr.rel (0) target = $region41
  $region40: #{rewardnet_forward.1} parent=0 // pred_region
    _
  $region41: #{rewardnet_forward.1} parent=0 // pred_fallthru
    _
  // Predicated region
  $region42: #{rewardnet_forward.1} parent=0 // pred_check
    _
  $region43: #{rewardnet_forward.1} parent=0 // pred_check_branch
    %527 = sbr.rel (0) target = $region45
  $region44: #{rewardnet_forward.1} parent=0 // pred_region
    _
  $region45: #{rewardnet_forward.1} parent=0 // pred_fallthru
    _

</llo_original>
